<compile_context>
chip_gen: v6e
topology: v6e:2x2x1
jax: 0.10.0
libtpu: 0.0.40
codegen_flags: <defaults>
</compile_context>

<pallas_src>
import functools

import numpy as np

import jax
import jax.numpy as jnp
from jax.experimental import pallas as pl
from jax.experimental.pallas import tpu as pltpu


def _interp_matrix(in_size, out_size, mode, align_corners):
    """1-D interpolation matrix M (out_size, in_size): out = M @ in."""
    if mode == "nearest":
        # PyTorch 'nearest': src = floor(dst * in/out), clamped.
        src = np.floor(np.arange(out_size) * (in_size / out_size)).astype(np.int64)
        src = np.clip(src, 0, in_size - 1)
        m = np.zeros((out_size, in_size), np.float32)
        m[np.arange(out_size), src] = 1.0
        return m
    if mode in ("linear", "bilinear"):
        if align_corners and out_size > 1:
            src = np.arange(out_size) * ((in_size - 1) / max(out_size - 1, 1))
        else:
            src = (np.arange(out_size) + 0.5) * (in_size / out_size) - 0.5
        src = np.clip(src, 0.0, in_size - 1)
        lo = np.floor(src).astype(np.int64)
        hi = np.minimum(lo + 1, in_size - 1)
        frac = (src - lo).astype(np.float32)
        m = np.zeros((out_size, in_size), np.float32)
        np.add.at(m, (np.arange(out_size), lo), 1.0 - frac)
        np.add.at(m, (np.arange(out_size), hi), frac)
        return m
    # TODO(synk): 'bicubic' / 'area' / antialiased modes have no clean separable
    # 2-tap-matrix form implemented here.
    raise NotImplementedError(f"mode={mode!r} not supported by this Pallas kernel")


def _vmem_limit_bytes():
    """Generation-aware VMEM limit: ~3/4 of physical, capped, safe fallback."""
    cap = 64 * 1024 * 1024  # conservative fallback (v7x per-TC VMEM)
    try:
        info = pltpu.get_tpu_info()
        cap = int(getattr(info, "vmem_capacity_bytes", cap)) or cap
    except Exception:
        pass
    return max(16 * 1024 * 1024, min((cap * 3) // 4, 100 * 1024 * 1024))


def _pick_planes_per_step(num_planes, bytes_per_plane, vmem_limit):
    """Largest plane block fitting ~half the VMEM limit; keep >=2 grid steps."""
    budget = vmem_limit // 2
    planes = max(1, budget // max(bytes_per_plane, 1))
    if num_planes >= 2:
        # At least 2 steps so DMA pipelining overlaps and both v7x TCs get work.
        planes = min(planes, -(-num_planes // 2))
    return int(min(planes, num_planes))


def _resize_kernel(x_ref, ct_ref, r_ref, o_ref, *, compute_dtype):
    # x_ref : (P, H, W)        plane block for this grid step
    # ct_ref: (W, W_out)       column interpolation matrix (transposed), resident
    # r_ref : (H_out, H)       row interpolation matrix, resident
    # o_ref : (P, H_out, W_out)
    p = x_ref.shape[0]
    x = x_ref[...].astype(compute_dtype)            # no-op for f32 / bf16 inputs
    ct = ct_ref[...]                                 # (W, W_out)
    r = r_ref[...]                                   # (H_out, H)

    # Broadcast the small matrices across the plane batch so both passes are
    # batched matmuls (the contraction structure Mosaic lowers natively).
    ct_b = jnp.broadcast_to(ct, (p,) + ct.shape)     # (P, W, W_out)
    r_b = jnp.broadcast_to(r, (p,) + r.shape)        # (P, H_out, H)

    # Column pass: (P,H,W) x (P,W,W_out) -> (P,H,W_out), f32 accumulation.
    xw = jnp.einsum("phw,pwo->pho", x, ct_b,
                    preferred_element_type=jnp.float32).astype(compute_dtype)
    # Row pass: (P,H_out,H) x (P,H,W_out) -> (P,H_out,W_out).
    out = jnp.einsum("pqh,pho->pqo", r_b, xw,
                     preferred_element_type=jnp.float32)
    o_ref[...] = out.astype(o_ref.dtype)


@functools.partial(
    jax.jit, static_argnames=("size", "scale_factor", "mode", "align_corners"))
def upsample_forward(x, size=None, scale_factor=None, mode="nearest",
                     align_corners=None):
    """Pallas equivalent of Upsample.forward == F.interpolate on NCHW input."""
    if x.ndim != 4:
        raise ValueError("expected NCHW input of rank 4")
    b, c, h, w = x.shape

    # Output size: exactly mirrors the module's forward().
    if not size:
        if isinstance(scale_factor, tuple):
            sf_h, sf_w = (float(f) for f in scale_factor)
        else:
            sf_h = sf_w = float(scale_factor)
        h_out, w_out = int(h * sf_h), int(w * sf_w)
    else:
        if isinstance(size, int):
            h_out = w_out = int(size)
        else:
            h_out, w_out = (int(s) for s in size)

    # bf16 fast path: keep data bf16, cast the matrices (exact for nearest).
    compute_dtype = jnp.bfloat16 if x.dtype == jnp.bfloat16 else jnp.float32
    c_itemsize = jnp.dtype(compute_dtype).itemsize
    in_itemsize = x.dtype.itemsize

    r_mat = jnp.asarray(_interp_matrix(h, h_out, mode, align_corners),
                        dtype=compute_dtype)                      # (H_out, H)
    ct_mat = jnp.asarray(_interp_matrix(w, w_out, mode, align_corners).T,
                         dtype=compute_dtype)                     # (W, W_out)

    num_planes = b * c
    x_flat = x.reshape(num_planes, h, w)

    # Per-plane VMEM footprint estimate: double-buffered in/out blocks, the f32
    # intermediate (+ its compute-dtype copy), broadcast matrices, cast copy.
    bytes_per_plane = (
        2 * h * w * in_itemsize
        + 2 * h_out * w_out * in_itemsize
        + h * w_out * (4 + c_itemsize)
        + (w * w_out + h_out * h) * c_itemsize
        + (h * w * c_itemsize if compute_dtype != x.dtype else 0))

    vmem_limit = _vmem_limit_bytes()
    planes_per_step = _pick_planes_per_step(num_planes, bytes_per_plane,
                                            vmem_limit)
    grid = (pl.cdiv(num_planes, planes_per_step),)

    flops = 2 * num_planes * (h * w * w_out + h_out * h * w_out)
    bytes_accessed = (num_planes * (h * w + h_out * w_out) * in_itemsize
                      + (h_out * h + w * w_out) * c_itemsize)

    out_flat = pl.pallas_call(
        functools.partial(_resize_kernel, compute_dtype=compute_dtype),
        out_shape=jax.ShapeDtypeStruct((num_planes, h_out, w_out), x.dtype),
        grid=grid,
        in_specs=[
            pl.BlockSpec((planes_per_step, h, w), lambda i: (i, 0, 0)),
            pl.BlockSpec((w, w_out), lambda i: (0, 0)),     # VMEM-resident
            pl.BlockSpec((h_out, h), lambda i: (0, 0)),     # VMEM-resident
        ],
        out_specs=pl.BlockSpec((planes_per_step, h_out, w_out),
                               lambda i: (i, 0, 0)),
        compiler_params=pltpu.CompilerParams(
            dimension_semantics=("parallel",),
            vmem_limit_bytes=int(vmem_limit),
        ),
        cost_estimate=pl.CostEstimate(
            flops=flops, transcendentals=0, bytes_accessed=bytes_accessed),
    )(x_flat, ct_mat, r_mat)

    return out_flat.reshape(b, c, h_out, w_out)


if __name__ == "__main__":
    key = jax.random.PRNGKey(0)
    B, C, H, W = 2, 4, 16, 16
    x = jax.random.normal(key, (B, C, H, W), jnp.float32)

    # Case 1: module defaults — scale_factor=2.0, mode='nearest'.
    out = upsample_forward(x, scale_factor=2.0)
    jax.block_until_ready(out)
    H_out, W_out = 32, 32
    rows = np.minimum(np.floor(np.arange(H_out) * (H / H_out)), H - 1).astype(np.int32)
    cols = np.minimum(np.floor(np.arange(W_out) * (W / W_out)), W - 1).astype(np.int32)
    ref = x[:, :, rows, :][:, :, :, cols]
    assert out.shape == (B, C, H_out, W_out)
    assert jnp.allclose(out, ref, atol=1e-6, rtol=1e-6)

    # Case 2: explicit (non-integer-ratio, odd-lane) size, nearest.
    out2 = upsample_forward(x, size=(24, 40))
    jax.block_until_ready(out2)
    rows2 = np.minimum(np.floor(np.arange(24) * (H / 24)), H - 1).astype(np.int32)
    cols2 = np.minimum(np.floor(np.arange(40) * (W / 40)), W - 1).astype(np.int32)
    ref2 = x[:, :, rows2, :][:, :, :, cols2]
    assert out2.shape == (B, C, 24, 40)
    assert jnp.allclose(out2, ref2, atol=1e-6, rtol=1e-6)

    # Case 3: bilinear partition-of-unity sanity check (constant stays constant).
    xc = jnp.full((B, C, H, W), 3.25, jnp.float32)
    out3 = upsample_forward(xc, scale_factor=2.0, mode="bilinear",
                            align_corners=False)
    jax.block_until_ready(out3)
    assert out3.shape == (B, C, 32, 32)
    assert jnp.allclose(out3, 3.25, atol=1e-5)

    # Case 4: bf16 fast path, nearest (exact 0/1 selection matrices).
    xb = x.astype(jnp.bfloat16)
    out4 = upsample_forward(xb, scale_factor=2.0)
    jax.block_until_ready(out4)
    refb = xb[:, :, rows, :][:, :, :, cols]
    assert out4.dtype == jnp.bfloat16
    assert jnp.array_equal(out4, refb)

    print("KERNEL_OK")
</pallas_src>

<mosaic_0001>
module attributes {stable_mosaic.version = 11 : i64} {
  func.func @_resize_kernel(%arg0: i32, %arg1: memref<4x16x16xf32, #tpu.memory_space<vmem>>, %arg2: memref<16x32xf32, #tpu.memory_space<vmem>>, %arg3: memref<32x16xf32, #tpu.memory_space<vmem>>, %arg4: memref<4x32x32xf32, #tpu.memory_space<vmem>>) attributes {dimension_semantics = [#tpu.dimension_semantics<parallel>], iteration_bounds = array<i64: 2>, scalar_prefetch = 0 : i64, scratch_operands = 0 : i64, tpu.core_type = #tpu.core_type<tc>, window_params = [{transform_indices = @transform_0, window_bounds = array<i64: 4, 16, 16>}, {pipeline_mode = #tpu.pipeline_mode<synchronous>, transform_indices = @transform_1, window_bounds = array<i64: 16, 32>}, {pipeline_mode = #tpu.pipeline_mode<synchronous>, transform_indices = @transform_2, window_bounds = array<i64: 32, 16>}, {transform_indices = @transform_3, window_bounds = array<i64: 4, 32, 32>}]} {
    %c0 = arith.constant 0 : index
    %c0_0 = arith.constant 0 : index
    %c0_1 = arith.constant 0 : index
    %0 = vector.load %arg1[%c0, %c0_0, %c0_1] : memref<4x16x16xf32, #tpu.memory_space<vmem>>, vector<4x16x16xf32>
    %c0_2 = arith.constant 0 : index
    %c0_3 = arith.constant 0 : index
    %1 = vector.load %arg2[%c0_2, %c0_3] : memref<16x32xf32, #tpu.memory_space<vmem>>, vector<16x32xf32>
    %c0_4 = arith.constant 0 : index
    %c0_5 = arith.constant 0 : index
    %2 = vector.load %arg3[%c0_4, %c0_5] : memref<32x16xf32, #tpu.memory_space<vmem>>, vector<32x16xf32>
    %3 = vector.shape_cast %1 : vector<16x32xf32> to vector<1x16x32xf32>
    %4 = vector.broadcast %3 : vector<1x16x32xf32> to vector<4x16x32xf32>
    %5 = vector.shape_cast %2 : vector<32x16xf32> to vector<1x32x16xf32>
    %6 = vector.broadcast %5 : vector<1x32x16xf32> to vector<4x32x16xf32>
    "tpu.trace_start"() <{level = 10 : i32, message = "phw,pwo->pho"}> : () -> ()
    %cst = arith.constant dense<0.000000e+00> : vector<4x16x32xf32>
    %7 = tpu.matmul %0, %4, %cst {dimension_numbers = #tpu.dot_dimension_numbers<[2], [1], [1], [2], [0, 0, 0, 1, 1, 2], [0], [0]>} : vector<4x16x16xf32>, vector<4x16x32xf32>, vector<4x16x32xf32> -> vector<4x16x32xf32>
    "tpu.trace_stop"() : () -> ()
    "tpu.trace_start"() <{level = 10 : i32, message = "pqh,pho->pqo"}> : () -> ()
    %cst_6 = arith.constant dense<0.000000e+00> : vector<4x32x32xf32>
    %8 = tpu.matmul %6, %7, %cst_6 {dimension_numbers = #tpu.dot_dimension_numbers<[2], [1], [1], [2], [0, 0, 0, 1, 1, 2], [0], [0]>} : vector<4x32x16xf32>, vector<4x16x32xf32>, vector<4x32x32xf32> -> vector<4x32x32xf32>
    "tpu.trace_stop"() : () -> ()
    %c0_7 = arith.constant 0 : index
    %c0_8 = arith.constant 0 : index
    %c0_9 = arith.constant 0 : index
    %9 = vector.load %arg4[%c0_7, %c0_8, %c0_9] : memref<4x32x32xf32, #tpu.memory_space<vmem>>, vector<4x32x32xf32>
    tpu.vector_store %arg4[%c0_7, %c0_8, %c0_9], %8 {strides = array<i32>} : memref<4x32x32xf32, #tpu.memory_space<vmem>>, vector<4x32x32xf32>,
    return
  }
  func.func @transform_0(%arg0: i32) -> (i32, i32, i32) {
    %c0_i32 = arith.constant 0 : i32
    %c0_i32_0 = arith.constant 0 : i32
    %c0_i32_1 = arith.constant 0 : i32
    return %arg0, %c0_i32, %c0_i32_0 : i32, i32, i32
  }
  func.func @transform_1(%arg0: i32) -> (i32, i32) {
    %c0_i32 = arith.constant 0 : i32
    %c0_i32_0 = arith.constant 0 : i32
    %c0_i32_1 = arith.constant 0 : i32
    return %c0_i32, %c0_i32_0 : i32, i32
  }
  func.func @transform_2(%arg0: i32) -> (i32, i32) {
    %c0_i32 = arith.constant 0 : i32
    %c0_i32_0 = arith.constant 0 : i32
    %c0_i32_1 = arith.constant 0 : i32
    return %c0_i32, %c0_i32_0 : i32, i32
  }
  func.func @transform_3(%arg0: i32) -> (i32, i32, i32) {
    %c0_i32 = arith.constant 0 : i32
    %c0_i32_0 = arith.constant 0 : i32
    %c0_i32_1 = arith.constant 0 : i32
    return %arg0, %c0_i32, %c0_i32_0 : i32, i32, i32
  }
}

</mosaic_0001>

<llo_original>
// kernel: upsample_forward.1
$region0: #{upsample_forward.1}
  #allocation0 [shape = 'u32[]', space=smem, size = 0x4, offset = 0x4, fixed_abs, tag = 'smem constant byte address 0x4 - core index']
  #allocation1 [shape = 'u32[144,128]{1,0:T(1,128)}', space=vmem, size = 0x12000, scoped, tag = 'internal scratch']
  %s0 = inlined_call_operand.hbm [shape: f32[8,16,16], index: 0, kind: input, shape index: {}]
  %s1 = inlined_call_operand.hbm [shape: f32[16,32], index: 1, kind: input, shape index: {}]
  %s2 = inlined_call_operand.hbm [shape: f32[32,16], index: 2, kind: input, shape index: {}]
  %s3 = inlined_call_operand.hbm [shape: f32[8,32,32], index: 3, kind: output, shape index: {}]
  %s4 = sld [smem:[#allocation0]]
  $region57: #{upsample_forward.1} parent=0
    _
  %s6 = ssub.s32 1, %s4
  %s7 = scalar_select 0, %s6, %s4
  $region1: #{upsample_forward.1} parent=0
    #allocation2 [shape = 'u8[65536]{0}', space=vmem, size = 0x10000, scoped, tag = 'input window, operand 0']
    #allocation3 [shape = 's32[2]{0}', space=sflag, size = 0x8, scoped, tag = 'scoped memory for upsample_forward.1']
    #allocation4 [shape = 's32[2]{0}', space=sflag, size = 0x8, scoped, tag = 'scoped memory for upsample_forward.1']
    #allocation5 [shape = 'u8[8192]{0}', space=vmem, size = 0x2000, scoped, tag = 'input window, operand 1, single buffered']
    #allocation6 [shape = 's32[1]{0}', space=sflag, size = 0x4, scoped, tag = 'scoped memory for upsample_forward.1']
    #allocation7 [shape = 'u8[16384]{0}', space=vmem, size = 0x4000, scoped, tag = 'input window, operand 2, single buffered']
    #allocation8 [shape = 'u8[131072]{0}', space=vmem, size = 0x20000, scoped, tag = 'output window, operand 0']
    %8 = vsyncpa [#allocation3], 0
    %s9 = scalar_lea.sflag [#allocation3], 1
    %10 = vsyncpa %s9, 0
    %11 = vsyncpa [#allocation6], 0
    %12 = vsyncpa [#allocation4], 0
    %s13 = scalar_lea.sflag [#allocation4], 1
    %14 = vsyncpa %s13, 0
    loop: start=0, step=1, limit=4
    $region2: #{upsample_forward.1} parent=1 // loop_pre_header
      _
    $region3: #{upsample_forward.1} parent=1 // loop_header
      %s16 = sphi 0, %s20
      %p17 = scmp.ge.s32.totalorder %s16, 4
      %s26 = sphi 0, %s28
      %s29 = sphi 0, %s26
      %s30 = sphi 0, %s29
      %s46 = sphi 0, %s30
      %s50 = sphi 0, %s50
      %s52 = sphi 0, %s50
      %s53 = sphi 0, %s52
      %s67 = sphi 0, %s53
      %s71 = sphi 0, %s71
      %s73 = sphi 0, %s71
      %s74 = sphi 0, %s73
      %s88 = sphi 0, %s74
      %s94 = sphi 0, %s96
      %s97 = sphi 0, %s94
      %s98 = sphi 0, %s97
      %s114 = sphi 0, %s98
    $region4: #{upsample_forward.1} parent=1 // loop_header_branch
      %19 = sbr.rel (%p17) target = $region8
    $region5: #{upsample_forward.1} parent=1 // loop_body
      %s21 = ssub.s32 %s16, 1
      %s22 = ssub.s32 %s16, 2
      %s23 = sadd.s32 %s16, 1
      %s24 = ssub.s32 %s16, %s23
      %p25 = scmp.eq.s32.totalorder %s24, 0
      %s27 = sadd.s32 %s26, 1
      %s28 = scalar_select %p25, %s26, %s27
      %p31 = pneg %p25
      %p32 = scmp.eq.s32.totalorder %s16, 1
      %p33 = por %p31, %p32
      %p34 = scmp.ne.s32.totalorder %s26, %s29
      %p35 = scmp.eq.s32.totalorder %s16, 0
      %p36 = por %p34, %p35
      %p37 = scmp.ne.s32.totalorder %s26, %s29
      %p38 = scmp.eq.s32.totalorder %s21, 1
      %p39 = por %p37, %p38
      %p40 = scmp.ne.s32.totalorder %s29, %s30
      %p41 = scmp.eq.s32.totalorder %s21, 0
      %p42 = por %p40, %p41
      %p43 = scmp.ne.s32.totalorder %s29, %s30
      %p44 = scmp.eq.s32.totalorder %s22, 1
      %p45 = por %p43, %p44
      %p47 = scmp.ne.s32.totalorder %s30, %s46
      %p48 = scmp.eq.s32.totalorder %s22, 0
      %p49 = por %p47, %p48
      %s51 = sadd.s32 %s50, 1
      %p54 = scmp.eq.s32.totalorder %s16, 1
      %p55 = scmp.ne.s32.totalorder %s50, %s52
      %p56 = scmp.eq.s32.totalorder %s16, 0
      %p57 = por %p55, %p56
      %p58 = scmp.ne.s32.totalorder %s50, %s52
      %p59 = scmp.eq.s32.totalorder %s21, 1
      %p60 = por %p58, %p59
      %p61 = scmp.ne.s32.totalorder %s52, %s53
      %p62 = scmp.eq.s32.totalorder %s21, 0
      %p63 = por %p61, %p62
      %p64 = scmp.ne.s32.totalorder %s52, %s53
      %p65 = scmp.eq.s32.totalorder %s22, 1
      %p66 = por %p64, %p65
      %p68 = scmp.ne.s32.totalorder %s53, %s67
      %p69 = scmp.eq.s32.totalorder %s22, 0
      %p70 = por %p68, %p69
      %s72 = sadd.s32 %s71, 1
      %p75 = scmp.eq.s32.totalorder %s16, 1
      %p76 = scmp.ne.s32.totalorder %s71, %s73
      %p77 = scmp.eq.s32.totalorder %s16, 0
      %p78 = por %p76, %p77
      %p79 = scmp.ne.s32.totalorder %s71, %s73
      %p80 = scmp.eq.s32.totalorder %s21, 1
      %p81 = por %p79, %p80
      %p82 = scmp.ne.s32.totalorder %s73, %s74
      %p83 = scmp.eq.s32.totalorder %s21, 0
      %p84 = por %p82, %p83
      %p85 = scmp.ne.s32.totalorder %s73, %s74
      %p86 = scmp.eq.s32.totalorder %s22, 1
      %p87 = por %p85, %p86
      %p89 = scmp.ne.s32.totalorder %s74, %s88
      %p90 = scmp.eq.s32.totalorder %s22, 0
      %p91 = por %p89, %p90
      %s92 = ssub.s32 %s16, %s23
      %p93 = scmp.eq.s32.totalorder %s92, 0
      %s95 = sadd.s32 %s94, 1
      %s96 = scalar_select %p93, %s94, %s95
      %p99 = pneg %p93
      %p100 = scmp.eq.s32.totalorder %s16, 1
      %p101 = por %p99, %p100
      %p102 = scmp.ne.s32.totalorder %s94, %s97
      %p103 = scmp.eq.s32.totalorder %s16, 0
      %p104 = por %p102, %p103
      %p105 = scmp.ne.s32.totalorder %s94, %s97
      %p106 = scmp.eq.s32.totalorder %s21, 1
      %p107 = por %p105, %p106
      %p108 = scmp.ne.s32.totalorder %s97, %s98
      %p109 = scmp.eq.s32.totalorder %s21, 0
      %p110 = por %p108, %p109
      %p111 = scmp.ne.s32.totalorder %s97, %s98
      %p112 = scmp.eq.s32.totalorder %s22, 1
      %p113 = por %p111, %p112
      %p115 = scmp.ne.s32.totalorder %s98, %s114
      %p116 = scmp.eq.s32.totalorder %s22, 0
      %p117 = por %p115, %p116
      %p118 = scmp.le.s32.totalorder 1, %s16
      %p119 = scmp.lt.s32.totalorder %s16, 3
      %p120 = pnand %p118, %p119
      %p121 = pneg %p120
      // Predicated region
      $region9: #{upsample_forward.1} parent=5 // pred_check
        _
      $region10: #{upsample_forward.1} parent=5 // pred_check_branch
        %123 = sbr.rel (%p120) target = $region12
      $region11: #{upsample_forward.1} parent=5 // pred_region
        %s124 = ssub.s32 %s16, 1
        // Predicated region
        $region13: #{upsample_forward.1} parent=11 // pred_check
          %p125 = pneg %p63
        $region14: #{upsample_forward.1} parent=11 // pred_check_branch
          %127 = sbr.rel (%p125) target = $region16
        $region15: #{upsample_forward.1} parent=11 // pred_region
          %s129 = ssub.s32 256, 256
          %130 = vsyncadd [#allocation6], %s129
          %s131 = sshll.u32 [#allocation5], 4
          %s132 = int_to_ptr.vmem [resolvable:$true] %s131
          %137 = dma.hbm_to_vmem [thread:$0]  %s1, 256, %s132, [#allocation6], 128, 128, 8
        $region16: #{upsample_forward.1} parent=11 // pred_fallthru
          _
        // Predicated region
        $region17: #{upsample_forward.1} parent=11 // pred_check
          %p138 = pneg %p84
        $region18: #{upsample_forward.1} parent=11 // pred_check_branch
          %140 = sbr.rel (%p138) target = $region20
        $region19: #{upsample_forward.1} parent=11 // pred_region
          %s142 = ssub.s32 512, 512
          %143 = vsyncadd [#allocation6], %s142
          %s144 = sshll.u32 [#allocation7], 4
          %s145 = int_to_ptr.vmem [resolvable:$true] %s144
          %150 = dma.hbm_to_vmem [thread:$0]  %s2, 512, %s145, [#allocation6], 128, 128, 8
        $region20: #{upsample_forward.1} parent=11 // pred_fallthru
          _
      $region12: #{upsample_forward.1} parent=5 // pred_fallthru
        _
      %p151 = scmp.lt.s32.totalorder %s16, 2
      // Predicated region
      $region21: #{upsample_forward.1} parent=5 // pred_check
        %p152 = pneg %p151
      $region22: #{upsample_forward.1} parent=5 // pred_check_branch
        %154 = sbr.rel (%p152) target = $region24
      $region23: #{upsample_forward.1} parent=5 // pred_region
        // Predicated region
        $region25: #{upsample_forward.1} parent=23 // pred_check
          %p155 = pneg %p36
        $region26: #{upsample_forward.1} parent=23 // pred_check_branch
          %157 = sbr.rel (%p155) target = $region28
        $region27: #{upsample_forward.1} parent=23 // pred_region
          %s158 = sand.u32 %s26, 1
          %s159 = scalar_lea.sflag [#allocation3], %s158
          %s160 = sand.u32 %s26, 1
          %s161 = smul.addr %s160, 64
          %s162 = scalar_lea.vmem [#allocation2], %s161
          %s163 = smul.u32 4, %s16
          %s165 = ssub.s32 1024, 1024
          %166 = vsyncadd %s159, %s165
          %s167 = smul.addr %s163, 2
          %s168 = smul.addr %s167, 128
          %s169 = scalar_lea.hbm %s0, %s168
          %s170 = sshll.u32 %s162, 4
          %s171 = int_to_ptr.vmem [resolvable:$true] %s170
          %176 = dma.hbm_to_vmem [thread:$0]  %s169, 1024, %s171, %s159, 128, 128, 8
        $region28: #{upsample_forward.1} parent=23 // pred_fallthru
          _
      $region24: #{upsample_forward.1} parent=5 // pred_fallthru
        _
      %p177 = scmp.le.s32.totalorder 1, %s16
      %p178 = scmp.lt.s32.totalorder %s16, 3
      %p179 = pnand %p177, %p178
      %p180 = pneg %p179
      // Predicated region
      $region29: #{upsample_forward.1} parent=5 // pred_check
        _
      $region30: #{upsample_forward.1} parent=5 // pred_check_branch
        %182 = sbr.rel (%p179) target = $region32
      $region31: #{upsample_forward.1} parent=5 // pred_region
        %s183 = ssub.s32 %s16, 1
        %s184 = sand.u32 %s29, 1
        %s185 = scalar_lea.sflag [#allocation3], %s184
        %s186 = sand.u32 %s29, 1
        %s187 = smul.addr %s186, 64
        %s188 = scalar_lea.vmem [#allocation2], %s187
        // Predicated region
        $region33: #{upsample_forward.1} parent=31 // pred_check
          %p189 = pneg %p42
        $region34: #{upsample_forward.1} parent=31 // pred_check_branch
          %191 = sbr.rel (%p189) target = $region36
        $region35: #{upsample_forward.1} parent=31 // pred_region
          %192 = dma.done %s185, 1024
        $region36: #{upsample_forward.1} parent=31 // pred_fallthru
          _
        // Predicated region
        $region37: #{upsample_forward.1} parent=31 // pred_check
          %p193 = pneg %p63
        $region38: #{upsample_forward.1} parent=31 // pred_check_branch
          %195 = sbr.rel (%p193) target = $region40
        $region39: #{upsample_forward.1} parent=31 // pred_region
          %196 = dma.done [#allocation6], 256
        $region40: #{upsample_forward.1} parent=31 // pred_fallthru
          _
        // Predicated region
        $region41: #{upsample_forward.1} parent=31 // pred_check
          %p197 = pneg %p84
        $region42: #{upsample_forward.1} parent=31 // pred_check_branch
          %199 = sbr.rel (%p197) target = $region44
        $region43: #{upsample_forward.1} parent=31 // pred_region
          %200 = dma.done [#allocation6], 512
        $region44: #{upsample_forward.1} parent=31 // pred_fallthru
          _
        %s201 = sand.u32 %s29, 1
        %s202 = scalar_lea.sflag [#allocation3], %s201
        %s203 = sand.u32 %s29, 1
        %s204 = smul.addr %s203, 64
        %s205 = scalar_lea.vmem [#allocation2], %s204
        %p206 = pneg %p42
        %p207 = pneg %p39
        %p208 = pneg %p63
        %p209 = pneg %p60
        %p210 = pneg %p84
        %p211 = pneg %p81
        %p212 = pneg %p110
        %p213 = pneg %p107
        %s214 = sand.u32 %s97, 1
        %s215 = scalar_lea.sflag [#allocation4], %s214
        %s216 = sand.u32 %s97, 1
        %s217 = smul.addr %s216, 128
        %s218 = scalar_lea.vmem [#allocation8], %s217
        %s219 = smul.u32 4, %s21
        %s220 = smul.u32 4, %s21
        %v221 = vld [vmem:[%s188] sm:$0xff]
        %v222 = vld [vmem:[%s188 + $0x8] sm:$0xff]
        %v223 = vld [vmem:[%s188 + $0x10] sm:$0xff]
        %v224 = vld [vmem:[%s188 + $0x18] sm:$0xff]
        %v225 = vld [vmem:[%s188 + $0x20] sm:$0xff]
        %v226 = vld [vmem:[%s188 + $0x28] sm:$0xff]
        %v227 = vld [vmem:[%s188 + $0x30] sm:$0xff]
        %v228 = vld [vmem:[%s188 + $0x38] sm:$0xff]
        %v229 = vld [vmem:[#allocation5] sm:$0xff]
        %v230 = vld [vmem:[#allocation5 + $0x8] sm:$0xff]
        %v231 = vld [vmem:[#allocation7] sm:$0xff]
        %v232 = vld [vmem:[#allocation7 + $0x8] sm:$0xff]
        %v233 = vld [vmem:[#allocation7 + $0x10] sm:$0xff]
        %v234 = vld [vmem:[#allocation7 + $0x18] sm:$0xff]
        %vm235 = vcmask 130048
        %v237 = vsel %vm235, %v221, 0
        %v240 = vsel %vm235, %v222, 0
        %242 = vmatprep.subr.mxu0 0.0
        %243 = vmatpush1.msra.mxu0 0.0
        %244 = vmatprep.subr.mxu0 0.0
        %245 = vmatpush1.msra.mxu0 0.0
        %246 = vmatprep.subr.mxu0 0.0
        %247 = vmatpush1.msra.mxu0 0.0
        %248 = vmatprep.subr.mxu0 0.0
        %249 = vmatpush1.msra.mxu0 0.0
        %250 = vmatprep.subr.mxu0 0.0
        %251 = vmatpush1.msra.mxu0 0.0
        %252 = vmatprep.subr.mxu0 0.0
        %253 = vmatpush1.msra.mxu0 0.0
        %254 = vmatprep.subr.mxu0 0.0
        %255 = vmatpush1.msra.mxu0 0.0
        %256 = vmatprep.subr.mxu0 0.0
        %257 = vmatpush1.msra.mxu0 0.0
        %258 = vmatprep.subr.mxu0 0.0
        %259 = vmatpush1.msra.mxu0 0.0
        %260 = vmatprep.subr.mxu0 0.0
        %261 = vmatpush1.msra.mxu0 0.0
        %262 = vmatprep.subr.mxu0 0.0
        %263 = vmatpush1.msra.mxu0 0.0
        %264 = vmatprep.subr.mxu0 0.0
        %265 = vmatpush1.msra.mxu0 0.0
        %266 = vmatprep.subr.mxu0 0.0
        %267 = vmatpush1.msra.mxu0 0.0
        %268 = vmatprep.subr.mxu0 0.0
        %269 = vmatpush1.msra.mxu0 0.0
        %270 = vmatprep.subr.mxu0 0.0
        %271 = vmatpush1.msra.mxu0 %v230
        %272 = vmatprep.subr.mxu0 0.0
        %273 = vmatpush1.msra.mxu0 %v229
        %274 = vmatprep.subr.mxu0 0.0
        %275 = vmatpush2.msra.mxu0 0.0
        %276 = vmatprep.subr.mxu0 0.0
        %277 = vmatpush2.msra.mxu0 0.0
        %278 = vmatprep.subr.mxu0 0.0
        %279 = vmatpush2.msra.mxu0 0.0
        %280 = vmatprep.subr.mxu0 0.0
        %281 = vmatpush2.msra.mxu0 0.0
        %282 = vmatprep.subr.mxu0 0.0
        %283 = vmatpush2.msra.mxu0 0.0
        %284 = vmatprep.subr.mxu0 0.0
        %285 = vmatpush2.msra.mxu0 0.0
        %286 = vmatprep.subr.mxu0 0.0
        %287 = vmatpush2.msra.mxu0 0.0
        %288 = vmatprep.subr.mxu0 0.0
        %289 = vmatpush2.msra.mxu0 0.0
        %290 = vmatprep.subr.mxu0 0.0
        %291 = vmatpush2.msra.mxu0 0.0
        %292 = vmatprep.subr.mxu0 0.0
        %293 = vmatpush2.msra.mxu0 0.0
        %294 = vmatprep.subr.mxu0 0.0
        %295 = vmatpush2.msra.mxu0 0.0
        %296 = vmatprep.subr.mxu0 0.0
        %297 = vmatpush2.msra.mxu0 0.0
        %298 = vmatprep.subr.mxu0 0.0
        %299 = vmatpush2.msra.mxu0 0.0
        %300 = vmatprep.subr.mxu0 0.0
        %301 = vmatpush2.msra.mxu0 0.0
        %302 = vmatprep.subr.mxu0 0.0
        %303 = vmatpush2.msra.mxu0 0.0
        %304 = vmatprep.subr.mxu0 0.0
        %305 = vmatpush2.msra.mxu0 0.0
        %306 = vmatprep.mubr.f32.mxu0 0.0
        %307 = vmatmul.mubr.f32.gmra.mxu0 %v237
        %v308 = vpop.f32.mrf.mxu0
        %v309 = vadd.f32 0.0, %v308
        %v310 = vpop.f32.mrf.mxu0
        %311 = vmatprep.mubr.f32.mxu0 0.0
        %312 = vmatmul.mubr.f32.gmra.mxu0 %v240
        %v313 = vpop.f32.mrf.mxu0
        %v314 = vadd.f32 0.0, %v313
        %v315 = vpop.f32.mrf.mxu0
        %316 = vdwg.mxu0
        %v318 = vsel %vm235, %v223, 0
        %v321 = vsel %vm235, %v224, 0
        %323 = vmatprep.subr.mxu0 0.0
        %324 = vmatpush1.msra.mxu0 0.0
        %325 = vmatprep.subr.mxu0 0.0
        %326 = vmatpush1.msra.mxu0 0.0
        %327 = vmatprep.subr.mxu0 0.0
        %328 = vmatpush1.msra.mxu0 0.0
        %329 = vmatprep.subr.mxu0 0.0
        %330 = vmatpush1.msra.mxu0 0.0
        %331 = vmatprep.subr.mxu0 0.0
        %332 = vmatpush1.msra.mxu0 0.0
        %333 = vmatprep.subr.mxu0 0.0
        %334 = vmatpush1.msra.mxu0 0.0
        %335 = vmatprep.subr.mxu0 0.0
        %336 = vmatpush1.msra.mxu0 0.0
        %337 = vmatprep.subr.mxu0 0.0
        %338 = vmatpush1.msra.mxu0 0.0
        %339 = vmatprep.subr.mxu0 0.0
        %340 = vmatpush1.msra.mxu0 0.0
        %341 = vmatprep.subr.mxu0 0.0
        %342 = vmatpush1.msra.mxu0 0.0
        %343 = vmatprep.subr.mxu0 0.0
        %344 = vmatpush1.msra.mxu0 0.0
        %345 = vmatprep.subr.mxu0 0.0
        %346 = vmatpush1.msra.mxu0 0.0
        %347 = vmatprep.subr.mxu0 0.0
        %348 = vmatpush1.msra.mxu0 0.0
        %349 = vmatprep.subr.mxu0 0.0
        %350 = vmatpush1.msra.mxu0 0.0
        %351 = vmatprep.subr.mxu0 0.0
        %352 = vmatpush1.msra.mxu0 %v230
        %353 = vmatprep.subr.mxu0 0.0
        %354 = vmatpush1.msra.mxu0 %v229
        %355 = vmatprep.subr.mxu0 0.0
        %356 = vmatpush2.msra.mxu0 0.0
        %357 = vmatprep.subr.mxu0 0.0
        %358 = vmatpush2.msra.mxu0 0.0
        %359 = vmatprep.subr.mxu0 0.0
        %360 = vmatpush2.msra.mxu0 0.0
        %361 = vmatprep.subr.mxu0 0.0
        %362 = vmatpush2.msra.mxu0 0.0
        %363 = vmatprep.subr.mxu0 0.0
        %364 = vmatpush2.msra.mxu0 0.0
        %365 = vmatprep.subr.mxu0 0.0
        %366 = vmatpush2.msra.mxu0 0.0
        %367 = vmatprep.subr.mxu0 0.0
        %368 = vmatpush2.msra.mxu0 0.0
        %369 = vmatprep.subr.mxu0 0.0
        %370 = vmatpush2.msra.mxu0 0.0
        %371 = vmatprep.subr.mxu0 0.0
        %372 = vmatpush2.msra.mxu0 0.0
        %373 = vmatprep.subr.mxu0 0.0
        %374 = vmatpush2.msra.mxu0 0.0
        %375 = vmatprep.subr.mxu0 0.0
        %376 = vmatpush2.msra.mxu0 0.0
        %377 = vmatprep.subr.mxu0 0.0
        %378 = vmatpush2.msra.mxu0 0.0
        %379 = vmatprep.subr.mxu0 0.0
        %380 = vmatpush2.msra.mxu0 0.0
        %381 = vmatprep.subr.mxu0 0.0
        %382 = vmatpush2.msra.mxu0 0.0
        %383 = vmatprep.subr.mxu0 0.0
        %384 = vmatpush2.msra.mxu0 0.0
        %385 = vmatprep.subr.mxu0 0.0
        %386 = vmatpush2.msra.mxu0 0.0
        %387 = vmatprep.mubr.f32.mxu0 0.0
        %388 = vmatmul.mubr.f32.gmra.mxu0 %v318
        %v389 = vpop.f32.mrf.mxu0
        %v390 = vadd.f32 0.0, %v389
        %v391 = vpop.f32.mrf.mxu0
        %392 = vmatprep.mubr.f32.mxu0 0.0
        %393 = vmatmul.mubr.f32.gmra.mxu0 %v321
        %v394 = vpop.f32.mrf.mxu0
        %v395 = vadd.f32 0.0, %v394
        %v396 = vpop.f32.mrf.mxu0
        %397 = vdwg.mxu0
        %v399 = vsel %vm235, %v225, 0
        %v402 = vsel %vm235, %v226, 0
        %404 = vmatprep.subr.mxu0 0.0
        %405 = vmatpush1.msra.mxu0 0.0
        %406 = vmatprep.subr.mxu0 0.0
        %407 = vmatpush1.msra.mxu0 0.0
        %408 = vmatprep.subr.mxu0 0.0
        %409 = vmatpush1.msra.mxu0 0.0
        %410 = vmatprep.subr.mxu0 0.0
        %411 = vmatpush1.msra.mxu0 0.0
        %412 = vmatprep.subr.mxu0 0.0
        %413 = vmatpush1.msra.mxu0 0.0
        %414 = vmatprep.subr.mxu0 0.0
        %415 = vmatpush1.msra.mxu0 0.0
        %416 = vmatprep.subr.mxu0 0.0
        %417 = vmatpush1.msra.mxu0 0.0
        %418 = vmatprep.subr.mxu0 0.0
        %419 = vmatpush1.msra.mxu0 0.0
        %420 = vmatprep.subr.mxu0 0.0
        %421 = vmatpush1.msra.mxu0 0.0
        %422 = vmatprep.subr.mxu0 0.0
        %423 = vmatpush1.msra.mxu0 0.0
        %424 = vmatprep.subr.mxu0 0.0
        %425 = vmatpush1.msra.mxu0 0.0
        %426 = vmatprep.subr.mxu0 0.0
        %427 = vmatpush1.msra.mxu0 0.0
        %428 = vmatprep.subr.mxu0 0.0
        %429 = vmatpush1.msra.mxu0 0.0
        %430 = vmatprep.subr.mxu0 0.0
        %431 = vmatpush1.msra.mxu0 0.0
        %432 = vmatprep.subr.mxu0 0.0
        %433 = vmatpush1.msra.mxu0 %v230
        %434 = vmatprep.subr.mxu0 0.0
        %435 = vmatpush1.msra.mxu0 %v229
        %436 = vmatprep.subr.mxu0 0.0
        %437 = vmatpush2.msra.mxu0 0.0
        %438 = vmatprep.subr.mxu0 0.0
        %439 = vmatpush2.msra.mxu0 0.0
        %440 = vmatprep.subr.mxu0 0.0
        %441 = vmatpush2.msra.mxu0 0.0
        %442 = vmatprep.subr.mxu0 0.0
        %443 = vmatpush2.msra.mxu0 0.0
        %444 = vmatprep.subr.mxu0 0.0
        %445 = vmatpush2.msra.mxu0 0.0
        %446 = vmatprep.subr.mxu0 0.0
        %447 = vmatpush2.msra.mxu0 0.0
        %448 = vmatprep.subr.mxu0 0.0
        %449 = vmatpush2.msra.mxu0 0.0
        %450 = vmatprep.subr.mxu0 0.0
        %451 = vmatpush2.msra.mxu0 0.0
        %452 = vmatprep.subr.mxu0 0.0
        %453 = vmatpush2.msra.mxu0 0.0
        %454 = vmatprep.subr.mxu0 0.0
        %455 = vmatpush2.msra.mxu0 0.0
        %456 = vmatprep.subr.mxu0 0.0
        %457 = vmatpush2.msra.mxu0 0.0
        %458 = vmatprep.subr.mxu0 0.0
        %459 = vmatpush2.msra.mxu0 0.0
        %460 = vmatprep.subr.mxu0 0.0
        %461 = vmatpush2.msra.mxu0 0.0
        %462 = vmatprep.subr.mxu0 0.0
        %463 = vmatpush2.msra.mxu0 0.0
        %464 = vmatprep.subr.mxu0 0.0
        %465 = vmatpush2.msra.mxu0 0.0
        %466 = vmatprep.subr.mxu0 0.0
        %467 = vmatpush2.msra.mxu0 0.0
        %468 = vmatprep.mubr.f32.mxu0 0.0
        %469 = vmatmul.mubr.f32.gmra.mxu0 %v399
        %v470 = vpop.f32.mrf.mxu0
        %v471 = vadd.f32 0.0, %v470
        %v472 = vpop.f32.mrf.mxu0
        %473 = vmatprep.mubr.f32.mxu0 0.0
        %474 = vmatmul.mubr.f32.gmra.mxu0 %v402
        %v475 = vpop.f32.mrf.mxu0
        %v476 = vadd.f32 0.0, %v475
        %v477 = vpop.f32.mrf.mxu0
        %478 = vdwg.mxu0
        %v480 = vsel %vm235, %v227, 0
        %v483 = vsel %vm235, %v228, 0
        %485 = vmatprep.subr.mxu0 0.0
        %486 = vmatpush1.msra.mxu0 0.0
        %487 = vmatprep.subr.mxu0 0.0
        %488 = vmatpush1.msra.mxu0 0.0
        %489 = vmatprep.subr.mxu0 0.0
        %490 = vmatpush1.msra.mxu0 0.0
        %491 = vmatprep.subr.mxu0 0.0
        %492 = vmatpush1.msra.mxu0 0.0
        %493 = vmatprep.subr.mxu0 0.0
        %494 = vmatpush1.msra.mxu0 0.0
        %495 = vmatprep.subr.mxu0 0.0
        %496 = vmatpush1.msra.mxu0 0.0
        %497 = vmatprep.subr.mxu0 0.0
        %498 = vmatpush1.msra.mxu0 0.0
        %499 = vmatprep.subr.mxu0 0.0
        %500 = vmatpush1.msra.mxu0 0.0
        %501 = vmatprep.subr.mxu0 0.0
        %502 = vmatpush1.msra.mxu0 0.0
        %503 = vmatprep.subr.mxu0 0.0
        %504 = vmatpush1.msra.mxu0 0.0
        %505 = vmatprep.subr.mxu0 0.0
        %506 = vmatpush1.msra.mxu0 0.0
        %507 = vmatprep.subr.mxu0 0.0
        %508 = vmatpush1.msra.mxu0 0.0
        %509 = vmatprep.subr.mxu0 0.0
        %510 = vmatpush1.msra.mxu0 0.0
        %511 = vmatprep.subr.mxu0 0.0
        %512 = vmatpush1.msra.mxu0 0.0
        %513 = vmatprep.subr.mxu0 0.0
        %514 = vmatpush1.msra.mxu0 %v230
        %515 = vmatprep.subr.mxu0 0.0
        %516 = vmatpush1.msra.mxu0 %v229
        %517 = vmatprep.subr.mxu0 0.0
        %518 = vmatpush2.msra.mxu0 0.0
        %519 = vmatprep.subr.mxu0 0.0
        %520 = vmatpush2.msra.mxu0 0.0
        %521 = vmatprep.subr.mxu0 0.0
        %522 = vmatpush2.msra.mxu0 0.0
        %523 = vmatprep.subr.mxu0 0.0
        %524 = vmatpush2.msra.mxu0 0.0
        %525 = vmatprep.subr.mxu0 0.0
        %526 = vmatpush2.msra.mxu0 0.0
        %527 = vmatprep.subr.mxu0 0.0
        %528 = vmatpush2.msra.mxu0 0.0
        %529 = vmatprep.subr.mxu0 0.0
        %530 = vmatpush2.msra.mxu0 0.0
        %531 = vmatprep.subr.mxu0 0.0
        %532 = vmatpush2.msra.mxu0 0.0
        %533 = vmatprep.subr.mxu0 0.0
        %534 = vmatpush2.msra.mxu0 0.0
        %535 = vmatprep.subr.mxu0 0.0
        %536 = vmatpush2.msra.mxu0 0.0
        %537 = vmatprep.subr.mxu0 0.0
        %538 = vmatpush2.msra.mxu0 0.0
        %539 = vmatprep.subr.mxu0 0.0
        %540 = vmatpush2.msra.mxu0 0.0
        %541 = vmatprep.subr.mxu0 0.0
        %542 = vmatpush2.msra.mxu0 0.0
        %543 = vmatprep.subr.mxu0 0.0
        %544 = vmatpush2.msra.mxu0 0.0
        %545 = vmatprep.subr.mxu0 0.0
        %546 = vmatpush2.msra.mxu0 0.0
        %547 = vmatprep.subr.mxu0 0.0
        %548 = vmatpush2.msra.mxu0 0.0
        %549 = vmatprep.mubr.f32.mxu0 0.0
        %550 = vmatmul.mubr.f32.gmra.mxu0 %v480
        %v551 = vpop.f32.mrf.mxu0
        %v552 = vadd.f32 0.0, %v551
        %v553 = vpop.f32.mrf.mxu0
        %554 = vmatprep.mubr.f32.mxu0 0.0
        %555 = vmatmul.mubr.f32.gmra.mxu0 %v483
        %v556 = vpop.f32.mrf.mxu0
        %v557 = vadd.f32 0.0, %v556
        %v558 = vpop.f32.mrf.mxu0
        %559 = vdwg.mxu0
        %v561 = vsel %vm235, %v231, 0
        %v564 = vsel %vm235, %v232, 0
        %v567 = vsel %vm235, %v233, 0
        %v570 = vsel %vm235, %v234, 0
        %572 = vmatprep.subr.mxu0 0.0
        %573 = vmatpush1.msra.mxu0 0.0
        %574 = vmatprep.subr.mxu0 0.0
        %575 = vmatpush1.msra.mxu0 0.0
        %576 = vmatprep.subr.mxu0 0.0
        %577 = vmatpush1.msra.mxu0 0.0
        %578 = vmatprep.subr.mxu0 0.0
        %579 = vmatpush1.msra.mxu0 0.0
        %580 = vmatprep.subr.mxu0 0.0
        %581 = vmatpush1.msra.mxu0 0.0
        %582 = vmatprep.subr.mxu0 0.0
        %583 = vmatpush1.msra.mxu0 0.0
        %584 = vmatprep.subr.mxu0 0.0
        %585 = vmatpush1.msra.mxu0 0.0
        %586 = vmatprep.subr.mxu0 0.0
        %587 = vmatpush1.msra.mxu0 0.0
        %588 = vmatprep.subr.mxu0 0.0
        %589 = vmatpush1.msra.mxu0 0.0
        %590 = vmatprep.subr.mxu0 0.0
        %591 = vmatpush1.msra.mxu0 0.0
        %592 = vmatprep.subr.mxu0 0.0
        %593 = vmatpush1.msra.mxu0 0.0
        %594 = vmatprep.subr.mxu0 0.0
        %595 = vmatpush1.msra.mxu0 0.0
        %596 = vmatprep.subr.mxu0 0.0
        %597 = vmatpush1.msra.mxu0 0.0
        %598 = vmatprep.subr.mxu0 0.0
        %599 = vmatpush1.msra.mxu0 0.0
        %600 = vmatprep.subr.mxu0 0.0
        %601 = vmatpush1.msra.mxu0 %v314
        %602 = vmatprep.subr.mxu0 0.0
        %603 = vmatpush1.msra.mxu0 %v309
        %604 = vmatprep.subr.mxu0 0.0
        %605 = vmatpush2.msra.mxu0 0.0
        %606 = vmatprep.subr.mxu0 0.0
        %607 = vmatpush2.msra.mxu0 0.0
        %608 = vmatprep.subr.mxu0 0.0
        %609 = vmatpush2.msra.mxu0 0.0
        %610 = vmatprep.subr.mxu0 0.0
        %611 = vmatpush2.msra.mxu0 0.0
        %612 = vmatprep.subr.mxu0 0.0
        %613 = vmatpush2.msra.mxu0 0.0
        %614 = vmatprep.subr.mxu0 0.0
        %615 = vmatpush2.msra.mxu0 0.0
        %616 = vmatprep.subr.mxu0 0.0
        %617 = vmatpush2.msra.mxu0 0.0
        %618 = vmatprep.subr.mxu0 0.0
        %619 = vmatpush2.msra.mxu0 0.0
        %620 = vmatprep.subr.mxu0 0.0
        %621 = vmatpush2.msra.mxu0 0.0
        %622 = vmatprep.subr.mxu0 0.0
        %623 = vmatpush2.msra.mxu0 0.0
        %624 = vmatprep.subr.mxu0 0.0
        %625 = vmatpush2.msra.mxu0 0.0
        %626 = vmatprep.subr.mxu0 0.0
        %627 = vmatpush2.msra.mxu0 0.0
        %628 = vmatprep.subr.mxu0 0.0
        %629 = vmatpush2.msra.mxu0 0.0
        %630 = vmatprep.subr.mxu0 0.0
        %631 = vmatpush2.msra.mxu0 0.0
        %632 = vmatprep.subr.mxu0 0.0
        %633 = vmatpush2.msra.mxu0 0.0
        %634 = vmatprep.subr.mxu0 0.0
        %635 = vmatpush2.msra.mxu0 0.0
        %636 = vmatprep.mubr.f32.mxu0 0.0
        %637 = vmatmul.mubr.f32.gmra.mxu0 %v561
        %v638 = vpop.f32.mrf.mxu0
        %v639 = vadd.f32 0.0, %v638
        %v640 = vpop.f32.mrf.mxu0
        %641 = vmatprep.mubr.f32.mxu0 0.0
        %642 = vmatmul.mubr.f32.gmra.mxu0 %v564
        %v643 = vpop.f32.mrf.mxu0
        %v644 = vadd.f32 0.0, %v643
        %v645 = vpop.f32.mrf.mxu0
        %646 = vmatprep.mubr.f32.mxu0 0.0
        %647 = vmatmul.mubr.f32.gmra.mxu0 %v567
        %v648 = vpop.f32.mrf.mxu0
        %v649 = vadd.f32 0.0, %v648
        %v650 = vpop.f32.mrf.mxu0
        %651 = vmatprep.mubr.f32.mxu0 0.0
        %652 = vmatmul.mubr.f32.gmra.mxu0 %v570
        %v653 = vpop.f32.mrf.mxu0
        %v654 = vadd.f32 0.0, %v653
        %v655 = vpop.f32.mrf.mxu0
        %656 = vdwg.mxu0
        %657 = vmatprep.subr.mxu0 0.0
        %658 = vmatpush1.msra.mxu0 0.0
        %659 = vmatprep.subr.mxu0 0.0
        %660 = vmatpush1.msra.mxu0 0.0
        %661 = vmatprep.subr.mxu0 0.0
        %662 = vmatpush1.msra.mxu0 0.0
        %663 = vmatprep.subr.mxu0 0.0
        %664 = vmatpush1.msra.mxu0 0.0
        %665 = vmatprep.subr.mxu0 0.0
        %666 = vmatpush1.msra.mxu0 0.0
        %667 = vmatprep.subr.mxu0 0.0
        %668 = vmatpush1.msra.mxu0 0.0
        %669 = vmatprep.subr.mxu0 0.0
        %670 = vmatpush1.msra.mxu0 0.0
        %671 = vmatprep.subr.mxu0 0.0
        %672 = vmatpush1.msra.mxu0 0.0
        %673 = vmatprep.subr.mxu0 0.0
        %674 = vmatpush1.msra.mxu0 0.0
        %675 = vmatprep.subr.mxu0 0.0
        %676 = vmatpush1.msra.mxu0 0.0
        %677 = vmatprep.subr.mxu0 0.0
        %678 = vmatpush1.msra.mxu0 0.0
        %679 = vmatprep.subr.mxu0 0.0
        %680 = vmatpush1.msra.mxu0 0.0
        %681 = vmatprep.subr.mxu0 0.0
        %682 = vmatpush1.msra.mxu0 0.0
        %683 = vmatprep.subr.mxu0 0.0
        %684 = vmatpush1.msra.mxu0 0.0
        %685 = vmatprep.subr.mxu0 0.0
        %686 = vmatpush1.msra.mxu0 %v395
        %687 = vmatprep.subr.mxu0 0.0
        %688 = vmatpush1.msra.mxu0 %v390
        %689 = vmatprep.subr.mxu0 0.0
        %690 = vmatpush2.msra.mxu0 0.0
        %691 = vmatprep.subr.mxu0 0.0
        %692 = vmatpush2.msra.mxu0 0.0
        %693 = vmatprep.subr.mxu0 0.0
        %694 = vmatpush2.msra.mxu0 0.0
        %695 = vmatprep.subr.mxu0 0.0
        %696 = vmatpush2.msra.mxu0 0.0
        %697 = vmatprep.subr.mxu0 0.0
        %698 = vmatpush2.msra.mxu0 0.0
        %699 = vmatprep.subr.mxu0 0.0
        %700 = vmatpush2.msra.mxu0 0.0
        %701 = vmatprep.subr.mxu0 0.0
        %702 = vmatpush2.msra.mxu0 0.0
        %703 = vmatprep.subr.mxu0 0.0
        %704 = vmatpush2.msra.mxu0 0.0
        %705 = vmatprep.subr.mxu0 0.0
        %706 = vmatpush2.msra.mxu0 0.0
        %707 = vmatprep.subr.mxu0 0.0
        %708 = vmatpush2.msra.mxu0 0.0
        %709 = vmatprep.subr.mxu0 0.0
        %710 = vmatpush2.msra.mxu0 0.0
        %711 = vmatprep.subr.mxu0 0.0
        %712 = vmatpush2.msra.mxu0 0.0
        %713 = vmatprep.subr.mxu0 0.0
        %714 = vmatpush2.msra.mxu0 0.0
        %715 = vmatprep.subr.mxu0 0.0
        %716 = vmatpush2.msra.mxu0 0.0
        %717 = vmatprep.subr.mxu0 0.0
        %718 = vmatpush2.msra.mxu0 0.0
        %719 = vmatprep.subr.mxu0 0.0
        %720 = vmatpush2.msra.mxu0 0.0
        %721 = vmatprep.mubr.f32.mxu0 0.0
        %722 = vmatmul.mubr.f32.gmra.mxu0 %v561
        %v723 = vpop.f32.mrf.mxu0
        %v724 = vadd.f32 0.0, %v723
        %v725 = vpop.f32.mrf.mxu0
        %726 = vmatprep.mubr.f32.mxu0 0.0
        %727 = vmatmul.mubr.f32.gmra.mxu0 %v564
        %v728 = vpop.f32.mrf.mxu0
        %v729 = vadd.f32 0.0, %v728
        %v730 = vpop.f32.mrf.mxu0
        %731 = vmatprep.mubr.f32.mxu0 0.0
        %732 = vmatmul.mubr.f32.gmra.mxu0 %v567
        %v733 = vpop.f32.mrf.mxu0
        %v734 = vadd.f32 0.0, %v733
        %v735 = vpop.f32.mrf.mxu0
        %736 = vmatprep.mubr.f32.mxu0 0.0
        %737 = vmatmul.mubr.f32.gmra.mxu0 %v570
        %v738 = vpop.f32.mrf.mxu0
        %v739 = vadd.f32 0.0, %v738
        %v740 = vpop.f32.mrf.mxu0
        %741 = vdwg.mxu0
        %742 = vmatprep.subr.mxu0 0.0
        %743 = vmatpush1.msra.mxu0 0.0
        %744 = vmatprep.subr.mxu0 0.0
        %745 = vmatpush1.msra.mxu0 0.0
        %746 = vmatprep.subr.mxu0 0.0
        %747 = vmatpush1.msra.mxu0 0.0
        %748 = vmatprep.subr.mxu0 0.0
        %749 = vmatpush1.msra.mxu0 0.0
        %750 = vmatprep.subr.mxu0 0.0
        %751 = vmatpush1.msra.mxu0 0.0
        %752 = vmatprep.subr.mxu0 0.0
        %753 = vmatpush1.msra.mxu0 0.0
        %754 = vmatprep.subr.mxu0 0.0
        %755 = vmatpush1.msra.mxu0 0.0
        %756 = vmatprep.subr.mxu0 0.0
        %757 = vmatpush1.msra.mxu0 0.0
        %758 = vmatprep.subr.mxu0 0.0
        %759 = vmatpush1.msra.mxu0 0.0
        %760 = vmatprep.subr.mxu0 0.0
        %761 = vmatpush1.msra.mxu0 0.0
        %762 = vmatprep.subr.mxu0 0.0
        %763 = vmatpush1.msra.mxu0 0.0
        %764 = vmatprep.subr.mxu0 0.0
        %765 = vmatpush1.msra.mxu0 0.0
        %766 = vmatprep.subr.mxu0 0.0
        %767 = vmatpush1.msra.mxu0 0.0
        %768 = vmatprep.subr.mxu0 0.0
        %769 = vmatpush1.msra.mxu0 0.0
        %770 = vmatprep.subr.mxu0 0.0
        %771 = vmatpush1.msra.mxu0 %v476
        %772 = vmatprep.subr.mxu0 0.0
        %773 = vmatpush1.msra.mxu0 %v471
        %774 = vmatprep.subr.mxu0 0.0
        %775 = vmatpush2.msra.mxu0 0.0
        %776 = vmatprep.subr.mxu0 0.0
        %777 = vmatpush2.msra.mxu0 0.0
        %778 = vmatprep.subr.mxu0 0.0
        %779 = vmatpush2.msra.mxu0 0.0
        %780 = vmatprep.subr.mxu0 0.0
        %781 = vmatpush2.msra.mxu0 0.0
        %782 = vmatprep.subr.mxu0 0.0
        %783 = vmatpush2.msra.mxu0 0.0
        %784 = vmatprep.subr.mxu0 0.0
        %785 = vmatpush2.msra.mxu0 0.0
        %786 = vmatprep.subr.mxu0 0.0
        %787 = vmatpush2.msra.mxu0 0.0
        %788 = vmatprep.subr.mxu0 0.0
        %789 = vmatpush2.msra.mxu0 0.0
        %790 = vmatprep.subr.mxu0 0.0
        %791 = vmatpush2.msra.mxu0 0.0
        %792 = vmatprep.subr.mxu0 0.0
        %793 = vmatpush2.msra.mxu0 0.0
        %794 = vmatprep.subr.mxu0 0.0
        %795 = vmatpush2.msra.mxu0 0.0
        %796 = vmatprep.subr.mxu0 0.0
        %797 = vmatpush2.msra.mxu0 0.0
        %798 = vmatprep.subr.mxu0 0.0
        %799 = vmatpush2.msra.mxu0 0.0
        %800 = vmatprep.subr.mxu0 0.0
        %801 = vmatpush2.msra.mxu0 0.0
        %802 = vmatprep.subr.mxu0 0.0
        %803 = vmatpush2.msra.mxu0 0.0
        %804 = vmatprep.subr.mxu0 0.0
        %805 = vmatpush2.msra.mxu0 0.0
        %806 = vmatprep.mubr.f32.mxu0 0.0
        %807 = vmatmul.mubr.f32.gmra.mxu0 %v561
        %v808 = vpop.f32.mrf.mxu0
        %v809 = vadd.f32 0.0, %v808
        %v810 = vpop.f32.mrf.mxu0
        %811 = vmatprep.mubr.f32.mxu0 0.0
        %812 = vmatmul.mubr.f32.gmra.mxu0 %v564
        %v813 = vpop.f32.mrf.mxu0
        %v814 = vadd.f32 0.0, %v813
        %v815 = vpop.f32.mrf.mxu0
        %816 = vmatprep.mubr.f32.mxu0 0.0
        %817 = vmatmul.mubr.f32.gmra.mxu0 %v567
        %v818 = vpop.f32.mrf.mxu0
        %v819 = vadd.f32 0.0, %v818
        %v820 = vpop.f32.mrf.mxu0
        %821 = vmatprep.mubr.f32.mxu0 0.0
        %822 = vmatmul.mubr.f32.gmra.mxu0 %v570
        %v823 = vpop.f32.mrf.mxu0
        %v824 = vadd.f32 0.0, %v823
        %v825 = vpop.f32.mrf.mxu0
        %826 = vdwg.mxu0
        %827 = vmatprep.subr.mxu0 0.0
        %828 = vmatpush1.msra.mxu0 0.0
        %829 = vmatprep.subr.mxu0 0.0
        %830 = vmatpush1.msra.mxu0 0.0
        %831 = vmatprep.subr.mxu0 0.0
        %832 = vmatpush1.msra.mxu0 0.0
        %833 = vmatprep.subr.mxu0 0.0
        %834 = vmatpush1.msra.mxu0 0.0
        %835 = vmatprep.subr.mxu0 0.0
        %836 = vmatpush1.msra.mxu0 0.0
        %837 = vmatprep.subr.mxu0 0.0
        %838 = vmatpush1.msra.mxu0 0.0
        %839 = vmatprep.subr.mxu0 0.0
        %840 = vmatpush1.msra.mxu0 0.0
        %841 = vmatprep.subr.mxu0 0.0
        %842 = vmatpush1.msra.mxu0 0.0
        %843 = vmatprep.subr.mxu0 0.0
        %844 = vmatpush1.msra.mxu0 0.0
        %845 = vmatprep.subr.mxu0 0.0
        %846 = vmatpush1.msra.mxu0 0.0
        %847 = vmatprep.subr.mxu0 0.0
        %848 = vmatpush1.msra.mxu0 0.0
        %849 = vmatprep.subr.mxu0 0.0
        %850 = vmatpush1.msra.mxu0 0.0
        %851 = vmatprep.subr.mxu0 0.0
        %852 = vmatpush1.msra.mxu0 0.0
        %853 = vmatprep.subr.mxu0 0.0
        %854 = vmatpush1.msra.mxu0 0.0
        %855 = vmatprep.subr.mxu0 0.0
        %856 = vmatpush1.msra.mxu0 %v557
        %857 = vmatprep.subr.mxu0 0.0
        %858 = vmatpush1.msra.mxu0 %v552
        %859 = vmatprep.subr.mxu0 0.0
        %860 = vmatpush2.msra.mxu0 0.0
        %861 = vmatprep.subr.mxu0 0.0
        %862 = vmatpush2.msra.mxu0 0.0
        %863 = vmatprep.subr.mxu0 0.0
        %864 = vmatpush2.msra.mxu0 0.0
        %865 = vmatprep.subr.mxu0 0.0
        %866 = vmatpush2.msra.mxu0 0.0
        %867 = vmatprep.subr.mxu0 0.0
        %868 = vmatpush2.msra.mxu0 0.0
        %869 = vmatprep.subr.mxu0 0.0
        %870 = vmatpush2.msra.mxu0 0.0
        %871 = vmatprep.subr.mxu0 0.0
        %872 = vmatpush2.msra.mxu0 0.0
        %873 = vmatprep.subr.mxu0 0.0
        %874 = vmatpush2.msra.mxu0 0.0
        %875 = vmatprep.subr.mxu0 0.0
        %876 = vmatpush2.msra.mxu0 0.0
        %877 = vmatprep.subr.mxu0 0.0
        %878 = vmatpush2.msra.mxu0 0.0
        %879 = vmatprep.subr.mxu0 0.0
        %880 = vmatpush2.msra.mxu0 0.0
        %881 = vmatprep.subr.mxu0 0.0
        %882 = vmatpush2.msra.mxu0 0.0
        %883 = vmatprep.subr.mxu0 0.0
        %884 = vmatpush2.msra.mxu0 0.0
        %885 = vmatprep.subr.mxu0 0.0
        %886 = vmatpush2.msra.mxu0 0.0
        %887 = vmatprep.subr.mxu0 0.0
        %888 = vmatpush2.msra.mxu0 0.0
        %889 = vmatprep.subr.mxu0 0.0
        %890 = vmatpush2.msra.mxu0 0.0
        %891 = vmatprep.mubr.f32.mxu0 0.0
        %892 = vmatmul.mubr.f32.gmra.mxu0 %v561
        %v893 = vpop.f32.mrf.mxu0
        %v894 = vadd.f32 0.0, %v893
        %v895 = vpop.f32.mrf.mxu0
        %896 = vmatprep.mubr.f32.mxu0 0.0
        %897 = vmatmul.mubr.f32.gmra.mxu0 %v564
        %v898 = vpop.f32.mrf.mxu0
        %v899 = vadd.f32 0.0, %v898
        %v900 = vpop.f32.mrf.mxu0
        %901 = vmatprep.mubr.f32.mxu0 0.0
        %902 = vmatmul.mubr.f32.gmra.mxu0 %v567
        %v903 = vpop.f32.mrf.mxu0
        %v904 = vadd.f32 0.0, %v903
        %v905 = vpop.f32.mrf.mxu0
        %906 = vmatprep.mubr.f32.mxu0 0.0
        %907 = vmatmul.mubr.f32.gmra.mxu0 %v570
        %v908 = vpop.f32.mrf.mxu0
        %v909 = vadd.f32 0.0, %v908
        %v910 = vpop.f32.mrf.mxu0
        %911 = vdwg.mxu0
        %vm912 = vcmask 261120
        %913 = vst.msk [vmem:[%s218] sm:$0xff] %vm912, %v639
        %914 = vst.msk [vmem:[%s218 + $0x8] sm:$0xff] %vm912, %v644
        %915 = vst.msk [vmem:[%s218 + $0x10] sm:$0xff] %vm912, %v649
        %916 = vst.msk [vmem:[%s218 + $0x18] sm:$0xff] %vm912, %v654
        %917 = vst.msk [vmem:[%s218 + $0x20] sm:$0xff] %vm912, %v724
        %918 = vst.msk [vmem:[%s218 + $0x28] sm:$0xff] %vm912, %v729
        %919 = vst.msk [vmem:[%s218 + $0x30] sm:$0xff] %vm912, %v734
        %920 = vst.msk [vmem:[%s218 + $0x38] sm:$0xff] %vm912, %v739
        %921 = vst.msk [vmem:[%s218 + $0x40] sm:$0xff] %vm912, %v809
        %922 = vst.msk [vmem:[%s218 + $0x48] sm:$0xff] %vm912, %v814
        %923 = vst.msk [vmem:[%s218 + $0x50] sm:$0xff] %vm912, %v819
        %924 = vst.msk [vmem:[%s218 + $0x58] sm:$0xff] %vm912, %v824
        %925 = vst.msk [vmem:[%s218 + $0x60] sm:$0xff] %vm912, %v894
        %926 = vst.msk [vmem:[%s218 + $0x68] sm:$0xff] %vm912, %v899
        %927 = vst.msk [vmem:[%s218 + $0x70] sm:$0xff] %vm912, %v904
        %928 = vst.msk [vmem:[%s218 + $0x78] sm:$0xff] %vm912, %v909
        %s929 = sand.u32 %s97, 1
        %s930 = scalar_lea.sflag [#allocation4], %s929
        %s931 = sand.u32 %s97, 1
        %s932 = smul.addr %s931, 128
        %s933 = scalar_lea.vmem [#allocation8], %s932
        // Predicated region
        $region45: #{upsample_forward.1} parent=31 // pred_check
          %p934 = pneg %p107
        $region46: #{upsample_forward.1} parent=31 // pred_check_branch
          %936 = sbr.rel (%p934) target = $region48
        $region47: #{upsample_forward.1} parent=31 // pred_region
          %s937 = smul.u32 4, %s21
          %s939 = ssub.s32 2048, 2048
          %940 = vsyncadd %s930, %s939
          %s941 = smul.addr %s937, 4
          %s942 = smul.addr %s941, 128
          %s943 = scalar_lea.hbm %s3, %s942
          %s944 = sshll.u32 %s933, 4
          %s945 = int_to_ptr.vmem [resolvable:$true] %s944
          %950 = dma.vmem_to_hbm [thread:$0]  %s945, 2048, %s943, %s930, 128, 128, 8
        $region48: #{upsample_forward.1} parent=31 // pred_fallthru
          _
      $region32: #{upsample_forward.1} parent=5 // pred_fallthru
        _
      %p951 = scmp.le.s32.totalorder 2, %s16
      // Predicated region
      $region49: #{upsample_forward.1} parent=5 // pred_check
        %p952 = pneg %p951
      $region50: #{upsample_forward.1} parent=5 // pred_check_branch
        %954 = sbr.rel (%p952) target = $region52
      $region51: #{upsample_forward.1} parent=5 // pred_region
        %s955 = ssub.s32 %s16, 2
        // Predicated region
        $region53: #{upsample_forward.1} parent=51 // pred_check
          %p956 = pneg %p113
        $region54: #{upsample_forward.1} parent=51 // pred_check_branch
          %958 = sbr.rel (%p956) target = $region56
        $region55: #{upsample_forward.1} parent=51 // pred_region
          %s959 = sand.u32 %s98, 1
          %s960 = scalar_lea.sflag [#allocation4], %s959
          %s961 = sand.u32 %s98, 1
          %s962 = smul.addr %s961, 128
          %s963 = scalar_lea.vmem [#allocation8], %s962
          %964 = dma.done %s960, 2048
        $region56: #{upsample_forward.1} parent=51 // pred_fallthru
          _
      $region52: #{upsample_forward.1} parent=5 // pred_fallthru
        _
    $region6: #{upsample_forward.1} parent=1 // loop_footer
      %s20 = sadd.s32 1, %s16
    $region7: #{upsample_forward.1} parent=1 // loop_footer_branch
      %15 = sbr.rel target = $region3
    $region8: #{upsample_forward.1} parent=1 // loop_exit
      _
    %965 = vsyncpa [#allocation3], 1
    %s966 = scalar_lea.sflag [#allocation3], 1
    %967 = vsyncpa %s966, 1
    %968 = vsyncpa [#allocation6], 1
    %969 = vsyncpa [#allocation4], 1
    %s970 = scalar_lea.sflag [#allocation4], 1
    %971 = vsyncpa %s970, 1

</llo_original>
